<compile_context>
chip_gen: v7x
topology: tpu7x:2x2x1
jax: 0.10.0
libtpu: 0.0.40
codegen_flags: <defaults>
</compile_context>

<pallas_src>
import jax
import jax.numpy as jnp
import numpy as np
from jax.experimental import pallas as pl
from jax.experimental.pallas import tpu as pltpu

_LANE = 128
_SHIFT = -128.0 / 255.0
_MIN_STEPS = 4  # >=2 for DMA pipelining everywhere, >=4 so v7x megacore has work per TC


def _device_kind() -> str:
    try:
        return jax.devices()[0].device_kind.lower()
    except Exception:
        return ""


def _row_cap(itemsize: int) -> int:
    """Per-block spatial-row budget (rows of 128 lanes x 3 channels), per chip gen."""
    kind = _device_kind()
    if "v6" in kind:
        rows = 4096   # 6 MiB/operand block -> 24 MiB double-buffered, < 32 MiB scoped default
    elif "v5" in kind or "v4" in kind or "v3" in kind:
        rows = 1024   # stay well inside v5e's 16 MiB scoped-VMEM default
    else:             # v7x (64 MiB physical VMEM) and unknown: balanced default
        rows = 2048
    # Rows above were sized for f32; keep the byte budget constant across dtypes.
    rows = (rows * 4) // max(itemsize, 1)
    return max(256, min(rows, 8192))


def _ycbcr2rgb_kernel(x_ref, o_ref):
    # x_ref / o_ref: VMEM blocks of shape (nb, 3, trows, 128).
    # Compute in f32 (no-op cast for f32 inputs, matches PyTorch numerics for bf16).
    y = x_ref[:, 0, :, :].astype(jnp.float32)
    cb = x_ref[:, 1, :, :].astype(jnp.float32) + _SHIFT
    cr = x_ref[:, 2, :, :].astype(jnp.float32) + _SHIFT
    # Statically unrolled per-channel stores so the LLO scheduler interleaves
    # the three vst streams with the VALU work.
    o_ref[:, 0, :, :] = (y + 1.402 * cr).astype(o_ref.dtype)
    o_ref[:, 1, :, :] = (y - 0.344136 * cb - 0.714136 * cr).astype(o_ref.dtype)
    o_ref[:, 2, :, :] = (y + 1.772 * cb).astype(o_ref.dtype)


def ycbcr_to_rgb_jpeg(image):
    """image: (N, 3, H, W) float YCbCr -> (N, 3, H, W) RGB (same dtype)."""
    N, C, H, W = image.shape
    assert C == 3, "ycbcr_to_rgb_jpeg expects 3 input channels"
    dtype = image.dtype
    itemsize = np.dtype(dtype).itemsize

    HW = H * W
    rows = pl.cdiv(HW, _LANE)
    HW_pad = rows * _LANE

    x = image.reshape(N, C, HW)
    if HW_pad != HW:
        # TODO(synk): handle the ragged (<128-elem) tail in-kernel (pl.ANY + masked
        # final chunk) to avoid this extra pad/slice HBM pass when H*W % 128 != 0.
        x = jnp.pad(x, ((0, 0), (0, 0), (0, HW_pad - HW)))
    x = x.reshape(N, C, rows, _LANE)

    # ---------------- tiling selection ----------------
    cap = _row_cap(itemsize)
    trows = min(rows, cap)            # cap is a multiple of 8; rows==trows is also legal
    nb = 1
    if N > 1 and rows <= cap // 2:
        # Pack several small images per block to keep per-step DMA near the sweet spot.
        nb = min(N, max(1, cap // max(rows, 1)))

    def _steps(nb_, trows_):
        return pl.cdiv(N, nb_) * pl.cdiv(rows, trows_)

    # Guarantee enough grid steps for double-buffering (all gens) and megacore (v7x):
    # first un-pack the batch, then split the spatial axis of large single images.
    while nb > 1 and _steps(nb, trows) < _MIN_STEPS:
        nb = max(1, nb // 2)
    if _steps(nb, trows) < _MIN_STEPS and rows > 8:
        spatial_splits = pl.cdiv(_MIN_STEPS, pl.cdiv(N, nb))
        cand = max(8, ((pl.cdiv(rows, spatial_splits) + 7) // 8) * 8)  # multiple of 8
        if cand < rows:
            trows = min(trows, cand)

    grid = (pl.cdiv(N, nb), pl.cdiv(rows, trows))
    block = pl.BlockSpec((nb, C, trows, _LANE), lambda b, r: (b, 0, r, 0))

    # Explicit scoped-VMEM budget: double-buffered input + output blocks + headroom.
    block_bytes = nb * C * trows * _LANE * itemsize
    vmem_limit = max(32 << 20, 4 * block_bytes + (8 << 20))

    out = pl.pallas_call(
        _ycbcr2rgb_kernel,
        out_shape=jax.ShapeDtypeStruct((N, C, rows, _LANE), dtype),
        grid=grid,
        in_specs=[block],
        out_specs=block,
        compiler_params=pltpu.CompilerParams(
            dimension_semantics=("parallel", "parallel"),
            vmem_limit_bytes=vmem_limit,
        ),
        cost_estimate=pl.CostEstimate(
            flops=11 * N * HW,
            transcendentals=0,
            bytes_accessed=2 * 3 * N * HW * itemsize,
        ),
    )(x)

    out = out.reshape(N, C, HW_pad)
    if HW_pad != HW:
        out = out[:, :, :HW]
    return out.reshape(N, C, H, W)


def _reference(image):
    # Pure-JAX transcription of the PyTorch module.
    matrix = jnp.asarray(
        np.array(
            [
                [1.0, 0.0, 1.402],
                [1.0, -0.344136, -0.714136],
                [1.0, 1.772, 0.0],
            ],
            dtype=np.float32,
        ).T
    )
    shift = jnp.array([0.0, -128.0 / 255.0, -128.0 / 255.0], dtype=jnp.float32)
    nhwc = jnp.transpose(image, (0, 2, 3, 1))
    out = jnp.tensordot(nhwc + shift, matrix, axes=1)
    return jnp.transpose(out, (0, 3, 1, 2))


if __name__ == "__main__":
    key = jax.random.PRNGKey(0)

    # Primary test: lane-friendly small shape (exercises batch-packing path).
    x = jax.random.uniform(key, (2, 3, 16, 16), dtype=jnp.float32)
    out = jax.block_until_ready(ycbcr_to_rgb_jpeg(x))
    ref = _reference(x)
    assert out.shape == (2, 3, 16, 16)
    assert out.dtype == jnp.float32
    np.testing.assert_allclose(np.asarray(out), np.asarray(ref), rtol=1e-5, atol=1e-5)

    # Secondary test: H*W not a multiple of 128 (exercises the pad/unpad path).
    x2 = jax.random.uniform(jax.random.PRNGKey(1), (1, 3, 20, 24), dtype=jnp.float32)
    out2 = jax.block_until_ready(ycbcr_to_rgb_jpeg(x2))
    ref2 = _reference(x2)
    np.testing.assert_allclose(np.asarray(out2), np.asarray(ref2), rtol=1e-5, atol=1e-5)

    # Third test: single image large enough to force a spatial split (>=MIN_STEPS
    # grid steps) with a partial last spatial block (masked OOB writes).
    x3 = jax.random.uniform(jax.random.PRNGKey(2), (1, 3, 40, 64), dtype=jnp.float32)
    out3 = jax.block_until_ready(ycbcr_to_rgb_jpeg(x3))
    ref3 = _reference(x3)
    np.testing.assert_allclose(np.asarray(out3), np.asarray(ref3), rtol=1e-5, atol=1e-5)

    print("KERNEL_OK")
</pallas_src>

<mosaic_0001>
module attributes {stable_mosaic.version = 11 : i64} {
  func.func @_ycbcr2rgb_kernel(%arg0: i32, %arg1: i32, %arg2: memref<1x3x2x128xf32, #tpu.memory_space<vmem>>, %arg3: memref<1x3x2x128xf32, #tpu.memory_space<vmem>>) attributes {dimension_semantics = [#tpu.dimension_semantics<parallel>, #tpu.dimension_semantics<parallel>], iteration_bounds = array<i64: 2, 1>, scalar_prefetch = 0 : i64, scratch_operands = 0 : i64, tpu.core_type = #tpu.core_type<tc>, window_params = [{transform_indices = @transform_0, window_bounds = array<i64: 1, 3, 2, 128>}, {transform_indices = @transform_1, window_bounds = array<i64: 1, 3, 2, 128>}]} {
    %c0 = arith.constant 0 : index
    %c0_0 = arith.constant 0 : index
    %c0_1 = arith.constant 0 : index
    %c0_2 = arith.constant 0 : index
    %0 = vector.load %arg2[%c0, %c0_0, %c0_1, %c0_2] : memref<1x3x2x128xf32, #tpu.memory_space<vmem>>, vector<1x1x2x128xf32>
    %1 = vector.shape_cast %0 : vector<1x1x2x128xf32> to vector<1x2x128xf32>
    %c0_3 = arith.constant 0 : index
    %c1 = arith.constant 1 : index
    %c0_4 = arith.constant 0 : index
    %c0_5 = arith.constant 0 : index
    %2 = vector.load %arg2[%c0_3, %c1, %c0_4, %c0_5] : memref<1x3x2x128xf32, #tpu.memory_space<vmem>>, vector<1x1x2x128xf32>
    %3 = vector.shape_cast %2 : vector<1x1x2x128xf32> to vector<1x2x128xf32>
    %cst = arith.constant -0.501960814 : f32
    %4 = vector.broadcast %cst : f32 to vector<1x2x128xf32>
    %5 = arith.addf %3, %4 : vector<1x2x128xf32>
    %c0_6 = arith.constant 0 : index
    %c2 = arith.constant 2 : index
    %c0_7 = arith.constant 0 : index
    %c0_8 = arith.constant 0 : index
    %6 = vector.load %arg2[%c0_6, %c2, %c0_7, %c0_8] : memref<1x3x2x128xf32, #tpu.memory_space<vmem>>, vector<1x1x2x128xf32>
    %7 = vector.shape_cast %6 : vector<1x1x2x128xf32> to vector<1x2x128xf32>
    %cst_9 = arith.constant -0.501960814 : f32
    %8 = vector.broadcast %cst_9 : f32 to vector<1x2x128xf32>
    %9 = arith.addf %7, %8 : vector<1x2x128xf32>
    %cst_10 = arith.constant 1.402000e+00 : f32
    %10 = vector.broadcast %cst_10 : f32 to vector<1x2x128xf32>
    %11 = arith.mulf %10, %9 : vector<1x2x128xf32>
    %12 = arith.addf %1, %11 : vector<1x2x128xf32>
    %c0_11 = arith.constant 0 : index
    %c0_12 = arith.constant 0 : index
    %c0_13 = arith.constant 0 : index
    %c0_14 = arith.constant 0 : index
    %13 = vector.load %arg3[%c0_11, %c0_12, %c0_13, %c0_14] : memref<1x3x2x128xf32, #tpu.memory_space<vmem>>, vector<1x1x2x128xf32>
    %14 = vector.shape_cast %13 : vector<1x1x2x128xf32> to vector<1x2x128xf32>
    %15 = vector.shape_cast %12 : vector<1x2x128xf32> to vector<1x1x2x128xf32>
    tpu.vector_store %arg3[%c0_11, %c0_12, %c0_13, %c0_14], %15 {strides = array<i32>} : memref<1x3x2x128xf32, #tpu.memory_space<vmem>>, vector<1x1x2x128xf32>,
    %cst_15 = arith.constant 3.441360e-01 : f32
    %16 = vector.broadcast %cst_15 : f32 to vector<1x2x128xf32>
    %17 = arith.mulf %16, %5 : vector<1x2x128xf32>
    %18 = arith.subf %1, %17 : vector<1x2x128xf32>
    %cst_16 = arith.constant 7.141360e-01 : f32
    %19 = vector.broadcast %cst_16 : f32 to vector<1x2x128xf32>
    %20 = arith.mulf %19, %9 : vector<1x2x128xf32>
    %21 = arith.subf %18, %20 : vector<1x2x128xf32>
    %c0_17 = arith.constant 0 : index
    %c1_18 = arith.constant 1 : index
    %c0_19 = arith.constant 0 : index
    %c0_20 = arith.constant 0 : index
    %22 = vector.load %arg3[%c0_17, %c1_18, %c0_19, %c0_20] : memref<1x3x2x128xf32, #tpu.memory_space<vmem>>, vector<1x1x2x128xf32>
    %23 = vector.shape_cast %22 : vector<1x1x2x128xf32> to vector<1x2x128xf32>
    %24 = vector.shape_cast %21 : vector<1x2x128xf32> to vector<1x1x2x128xf32>
    tpu.vector_store %arg3[%c0_17, %c1_18, %c0_19, %c0_20], %24 {strides = array<i32>} : memref<1x3x2x128xf32, #tpu.memory_space<vmem>>, vector<1x1x2x128xf32>,
    %cst_21 = arith.constant 1.772000e+00 : f32
    %25 = vector.broadcast %cst_21 : f32 to vector<1x2x128xf32>
    %26 = arith.mulf %25, %5 : vector<1x2x128xf32>
    %27 = arith.addf %1, %26 : vector<1x2x128xf32>
    %c0_22 = arith.constant 0 : index
    %c2_23 = arith.constant 2 : index
    %c0_24 = arith.constant 0 : index
    %c0_25 = arith.constant 0 : index
    %28 = vector.load %arg3[%c0_22, %c2_23, %c0_24, %c0_25] : memref<1x3x2x128xf32, #tpu.memory_space<vmem>>, vector<1x1x2x128xf32>
    %29 = vector.shape_cast %28 : vector<1x1x2x128xf32> to vector<1x2x128xf32>
    %30 = vector.shape_cast %27 : vector<1x2x128xf32> to vector<1x1x2x128xf32>
    tpu.vector_store %arg3[%c0_22, %c2_23, %c0_24, %c0_25], %30 {strides = array<i32>} : memref<1x3x2x128xf32, #tpu.memory_space<vmem>>, vector<1x1x2x128xf32>,
    return
  }
  func.func @transform_0(%arg0: i32, %arg1: i32) -> (i32, i32, i32, i32) {
    %c0_i32 = arith.constant 0 : i32
    %c0_i32_0 = arith.constant 0 : i32
    %c0_i32_1 = arith.constant 0 : i32
    return %arg0, %c0_i32, %arg1, %c0_i32_0 : i32, i32, i32, i32
  }
  func.func @transform_1(%arg0: i32, %arg1: i32) -> (i32, i32, i32, i32) {
    %c0_i32 = arith.constant 0 : i32
    %c0_i32_0 = arith.constant 0 : i32
    %c0_i32_1 = arith.constant 0 : i32
    return %arg0, %c0_i32, %arg1, %c0_i32_0 : i32, i32, i32, i32
  }
}

</mosaic_0001>

<llo_original>
// kernel: tpu_custom_call.1
$region0: #{tpu_custom_call.1}
  #allocation0 [shape = 'u32[]', space=smem, size = 0x4, offset = 0x4, fixed_abs, tag = 'smem constant byte address 0x4 - core index']
  #allocation1 [shape = 'u32[144,128]{1,0:T(1,128)}', space=vmem, size = 0x12000, scoped, tag = 'internal scratch']
  %s0 = inlined_call_operand.hbm [shape: f32[2,3,2,128], index: 0, kind: input, shape index: {}]
  %s1 = inlined_call_operand.hbm [shape: f32[2,3,2,128], index: 1, kind: output, shape index: {}]
  %s2 = sld [smem:[#allocation0]]
  $region41: #{tpu_custom_call.1} parent=0
    _
  %s4 = ssub.s32 1, %s2
  %s5 = scalar_select 0, %s4, %s2
  $region1: #{tpu_custom_call.1} parent=0
    #allocation2 [shape = 'u8[6144]{0}', space=vmem, size = 0x1800, scoped, tag = 'input window, operand 0']
    #allocation3 [shape = 's32[2]{0}', space=sflag, size = 0x8, scoped, tag = 'scoped memory for tpu_custom_call.1']
    #allocation4 [shape = 's32[2]{0}', space=sflag, size = 0x8, scoped, tag = 'scoped memory for tpu_custom_call.1']
    #allocation5 [shape = 'u8[6144]{0}', space=vmem, size = 0x1800, scoped, tag = 'output window, operand 0']
    %6 = vsyncpa [#allocation3], 0
    %s7 = scalar_lea.sflag [#allocation3], 1
    %8 = vsyncpa %s7, 0
    %9 = vsyncpa [#allocation4], 0
    %s10 = scalar_lea.sflag [#allocation4], 1
    %11 = vsyncpa %s10, 0
    loop: start=0, step=1, limit=4
    $region2: #{tpu_custom_call.1} parent=1 // loop_pre_header
      _
    $region3: #{tpu_custom_call.1} parent=1 // loop_header
      %s13 = sphi 0, %s17
      %p14 = scmp.ge.s32.totalorder %s13, 4
      %s20 = sphi 0, %s32
      %s21 = sphi 0, %s28
      %s22 = sphi 0, %s20
      %s23 = sphi 0, %s21
      %s24 = sphi 0, %s22
      %s25 = sphi 0, %s23
      %s37 = sphi 0, %s39
      %s40 = sphi 0, %s37
      %s41 = sphi 0, %s40
      %s57 = sphi 0, %s41
      %s65 = sphi 0, %s67
      %s68 = sphi 0, %s65
      %s69 = sphi 0, %s68
      %s85 = sphi 0, %s69
    $region4: #{tpu_custom_call.1} parent=1 // loop_header_branch
      %16 = sbr.rel (%p14) target = $region8
    $region5: #{tpu_custom_call.1} parent=1 // loop_body
      %s18 = ssub.s32 %s13, 1
      %s19 = ssub.s32 %s13, 2
      %s26 = sadd.s32 1, %s21
      %p27 = scmp.ge.s32.totalorder %s26, 1
      %s28 = scalar_select %p27, 0, %s26
      %s29 = sadd.s32 1, %s20
      %s30 = scalar_select %p27, %s29, %s20
      %p31 = scmp.ge.s32.totalorder %s30, 2
      %s32 = scalar_select %p31, 0, %s30
      %s33 = ssub.s32 %s20, %s32
      %s34 = ssub.s32 %s21, %s28
      %s35 = sor.u32 %s33, %s34
      %p36 = scmp.eq.s32.totalorder %s35, 0
      %s38 = sadd.s32 %s37, 1
      %s39 = scalar_select %p36, %s37, %s38
      %p42 = pneg %p36
      %p43 = scmp.eq.s32.totalorder %s13, 1
      %p44 = por %p42, %p43
      %p45 = scmp.ne.s32.totalorder %s37, %s40
      %p46 = scmp.eq.s32.totalorder %s13, 0
      %p47 = por %p45, %p46
      %p48 = scmp.ne.s32.totalorder %s37, %s40
      %p49 = scmp.eq.s32.totalorder %s18, 1
      %p50 = por %p48, %p49
      %p51 = scmp.ne.s32.totalorder %s40, %s41
      %p52 = scmp.eq.s32.totalorder %s18, 0
      %p53 = por %p51, %p52
      %p54 = scmp.ne.s32.totalorder %s40, %s41
      %p55 = scmp.eq.s32.totalorder %s19, 1
      %p56 = por %p54, %p55
      %p58 = scmp.ne.s32.totalorder %s41, %s57
      %p59 = scmp.eq.s32.totalorder %s19, 0
      %p60 = por %p58, %p59
      %s61 = ssub.s32 %s20, %s32
      %s62 = ssub.s32 %s21, %s28
      %s63 = sor.u32 %s61, %s62
      %p64 = scmp.eq.s32.totalorder %s63, 0
      %s66 = sadd.s32 %s65, 1
      %s67 = scalar_select %p64, %s65, %s66
      %p70 = pneg %p64
      %p71 = scmp.eq.s32.totalorder %s13, 1
      %p72 = por %p70, %p71
      %p73 = scmp.ne.s32.totalorder %s65, %s68
      %p74 = scmp.eq.s32.totalorder %s13, 0
      %p75 = por %p73, %p74
      %p76 = scmp.ne.s32.totalorder %s65, %s68
      %p77 = scmp.eq.s32.totalorder %s18, 1
      %p78 = por %p76, %p77
      %p79 = scmp.ne.s32.totalorder %s68, %s69
      %p80 = scmp.eq.s32.totalorder %s18, 0
      %p81 = por %p79, %p80
      %p82 = scmp.ne.s32.totalorder %s68, %s69
      %p83 = scmp.eq.s32.totalorder %s19, 1
      %p84 = por %p82, %p83
      %p86 = scmp.ne.s32.totalorder %s69, %s85
      %p87 = scmp.eq.s32.totalorder %s19, 0
      %p88 = por %p86, %p87
      %p89 = scmp.le.s32.totalorder 1, %s13
      %p90 = scmp.lt.s32.totalorder %s13, 3
      %p91 = pnand %p89, %p90
      %p92 = pneg %p91
      // Predicated region
      $region9: #{tpu_custom_call.1} parent=5 // pred_check
        _
      $region10: #{tpu_custom_call.1} parent=5 // pred_check_branch
        %94 = sbr.rel (%p91) target = $region12
      $region11: #{tpu_custom_call.1} parent=5 // pred_region
        %s95 = ssub.s32 %s13, 1
      $region12: #{tpu_custom_call.1} parent=5 // pred_fallthru
        _
      %p96 = scmp.lt.s32.totalorder %s13, 2
      // Predicated region
      $region13: #{tpu_custom_call.1} parent=5 // pred_check
        %p97 = pneg %p96
      $region14: #{tpu_custom_call.1} parent=5 // pred_check_branch
        %99 = sbr.rel (%p97) target = $region16
      $region15: #{tpu_custom_call.1} parent=5 // pred_region
        // Predicated region
        $region17: #{tpu_custom_call.1} parent=15 // pred_check
          %p100 = pneg %p47
        $region18: #{tpu_custom_call.1} parent=15 // pred_check_branch
          %102 = sbr.rel (%p100) target = $region20
        $region19: #{tpu_custom_call.1} parent=15 // pred_region
          %s103 = sand.u32 %s37, 1
          %s104 = scalar_lea.sflag [#allocation3], %s103
          %s105 = sand.u32 %s37, 1
          %s106 = smul.addr %s105, 6
          %s107 = scalar_lea.vmem [#allocation2], %s106
          %s109 = ssub.s32 96, 96
          %110 = vsyncadd %s104, %s109
          %s111 = smul.addr %s20, 3
          %s112 = sadd.s32 %s21, %s111
          %s113 = smul.addr %s112, 32
          %s114 = scalar_lea.hbm %s0, %s113
          %s115 = sshll.u32 %s107, 4
          %s116 = int_to_ptr.vmem [resolvable:$true] %s115
          %121 = dma.hbm_to_vmem [thread:$0]  %s114, 96, %s116, %s104, 32, 32, 2
        $region20: #{tpu_custom_call.1} parent=15 // pred_fallthru
          _
      $region16: #{tpu_custom_call.1} parent=5 // pred_fallthru
        _
      %p122 = scmp.le.s32.totalorder 1, %s13
      %p123 = scmp.lt.s32.totalorder %s13, 3
      %p124 = pnand %p122, %p123
      %p125 = pneg %p124
      // Predicated region
      $region21: #{tpu_custom_call.1} parent=5 // pred_check
        _
      $region22: #{tpu_custom_call.1} parent=5 // pred_check_branch
        %127 = sbr.rel (%p124) target = $region24
      $region23: #{tpu_custom_call.1} parent=5 // pred_region
        %s128 = ssub.s32 %s13, 1
        %s129 = sand.u32 %s40, 1
        %s130 = scalar_lea.sflag [#allocation3], %s129
        %s131 = sand.u32 %s40, 1
        %s132 = smul.addr %s131, 6
        %s133 = scalar_lea.vmem [#allocation2], %s132
        // Predicated region
        $region25: #{tpu_custom_call.1} parent=23 // pred_check
          %p134 = pneg %p53
        $region26: #{tpu_custom_call.1} parent=23 // pred_check_branch
          %136 = sbr.rel (%p134) target = $region28
        $region27: #{tpu_custom_call.1} parent=23 // pred_region
          %137 = dma.done %s130, 96
        $region28: #{tpu_custom_call.1} parent=23 // pred_fallthru
          _
        %s138 = sand.u32 %s40, 1
        %s139 = scalar_lea.sflag [#allocation3], %s138
        %s140 = sand.u32 %s40, 1
        %s141 = smul.addr %s140, 6
        %s142 = scalar_lea.vmem [#allocation2], %s141
        %p143 = pneg %p53
        %p144 = pneg %p50
        %p145 = pneg %p81
        %p146 = pneg %p78
        %s147 = sand.u32 %s68, 1
        %s148 = scalar_lea.sflag [#allocation4], %s147
        %s149 = sand.u32 %s68, 1
        %s150 = smul.addr %s149, 6
        %s151 = scalar_lea.vmem [#allocation5], %s150
        %v152 = vld [vmem:[%s133] sm:$0x3]
        %s153 = scalar_lea.vmem %s133, 2 [#allocation2]
        %v154 = vld [vmem:[%s153] sm:$0x3]
        %v155 = vadd.f32 %v154, -0.5019608
        %s156 = scalar_lea.vmem %s133, 4 [#allocation2]
        %v157 = vld [vmem:[%s156] sm:$0x3]
        %v158 = vadd.f32 %v157, -0.5019608
        %v159 = vmul.f32 %v158, 1.402
        %v160 = vadd.f32 %v152, %v159
        %161 = vst [vmem:[%s151] sm:$0x3] %v160
        %v162 = vmul.f32 %v155, 0.344136
        %v163 = vsub.f32 %v152, %v162
        %v164 = vmul.f32 %v158, 0.714136
        %v165 = vsub.f32 %v163, %v164
        %s166 = scalar_lea.vmem %s151, 2 [#allocation5]
        %167 = vst [vmem:[%s166] sm:$0x3] %v165
        %v168 = vmul.f32 %v155, 1.772
        %v169 = vadd.f32 %v152, %v168
        %s170 = scalar_lea.vmem %s151, 4 [#allocation5]
        %171 = vst [vmem:[%s170] sm:$0x3] %v169
        %s172 = sand.u32 %s68, 1
        %s173 = scalar_lea.sflag [#allocation4], %s172
        %s174 = sand.u32 %s68, 1
        %s175 = smul.addr %s174, 6
        %s176 = scalar_lea.vmem [#allocation5], %s175
        // Predicated region
        $region29: #{tpu_custom_call.1} parent=23 // pred_check
          %p177 = pneg %p78
        $region30: #{tpu_custom_call.1} parent=23 // pred_check_branch
          %179 = sbr.rel (%p177) target = $region32
        $region31: #{tpu_custom_call.1} parent=23 // pred_region
          %s181 = ssub.s32 96, 96
          %182 = vsyncadd %s173, %s181
          %s183 = smul.addr %s22, 3
          %s184 = sadd.s32 %s23, %s183
          %s185 = smul.addr %s184, 32
          %s186 = scalar_lea.hbm %s1, %s185
          %s187 = sshll.u32 %s176, 4
          %s188 = int_to_ptr.vmem [resolvable:$true] %s187
          %193 = dma.vmem_to_hbm [thread:$0]  %s188, 96, %s186, %s173, 32, 32, 2
        $region32: #{tpu_custom_call.1} parent=23 // pred_fallthru
          _
      $region24: #{tpu_custom_call.1} parent=5 // pred_fallthru
        _
      %p194 = scmp.le.s32.totalorder 2, %s13
      // Predicated region
      $region33: #{tpu_custom_call.1} parent=5 // pred_check
        %p195 = pneg %p194
      $region34: #{tpu_custom_call.1} parent=5 // pred_check_branch
        %197 = sbr.rel (%p195) target = $region36
      $region35: #{tpu_custom_call.1} parent=5 // pred_region
        %s198 = ssub.s32 %s13, 2
        // Predicated region
        $region37: #{tpu_custom_call.1} parent=35 // pred_check
          %p199 = pneg %p84
        $region38: #{tpu_custom_call.1} parent=35 // pred_check_branch
          %201 = sbr.rel (%p199) target = $region40
        $region39: #{tpu_custom_call.1} parent=35 // pred_region
          %s202 = sand.u32 %s69, 1
          %s203 = scalar_lea.sflag [#allocation4], %s202
          %s204 = sand.u32 %s69, 1
          %s205 = smul.addr %s204, 6
          %s206 = scalar_lea.vmem [#allocation5], %s205
          %207 = dma.done %s203, 96
        $region40: #{tpu_custom_call.1} parent=35 // pred_fallthru
          _
      $region36: #{tpu_custom_call.1} parent=5 // pred_fallthru
        _
    $region6: #{tpu_custom_call.1} parent=1 // loop_footer
      %s17 = sadd.s32 1, %s13
    $region7: #{tpu_custom_call.1} parent=1 // loop_footer_branch
      %12 = sbr.rel target = $region3
    $region8: #{tpu_custom_call.1} parent=1 // loop_exit
      _
    %208 = vsyncpa [#allocation3], 1
    %s209 = scalar_lea.sflag [#allocation3], 1
    %210 = vsyncpa %s209, 1
    %211 = vsyncpa [#allocation4], 1
    %s212 = scalar_lea.sflag [#allocation4], 1
    %213 = vsyncpa %s212, 1

</llo_original>
